<compile_context>
chip_gen: v7x
topology: tpu7x:2x2x1
jax: 0.10.0
libtpu: 0.0.40
codegen_flags: <defaults>
</compile_context>

<pallas_src>
import jax
import jax.numpy as jnp
from jax.experimental import pallas as pl
from jax.experimental.pallas import tpu as pltpu

LANES = 128
_MIB = 1024 * 1024


def _device_config():
    """Generation-aware tile size / VMEM budget / TensorCore split count."""
    kind = ""
    try:
        kind = jax.devices()[0].device_kind.lower()
    except Exception:
        pass
    if "v7" in kind:
        # 2 TCs/chip, 64 MiB physical VMEM per TC, ~3.2 TB/s HBM.
        # TODO(synk): verify in a profile that the "parallel" axis really
        # shards across both TensorCores; drop the split if one TC saturates.
        return dict(max_block_rows=8192, vmem_limit=48 * _MIB, num_splits=2)
    if "v6" in kind:
        # 1 TC, 128 MiB VMEM, ~1.3 TB/s HBM.
        return dict(max_block_rows=8192, vmem_limit=64 * _MIB, num_splits=1)
    if "v5p" in kind or "v4" in kind:
        # 2 TCs (megacore), 128 MiB VMEM.
        return dict(max_block_rows=8192, vmem_limit=64 * _MIB, num_splits=2)
    if "v5" in kind:
        # v5e: 1 TC, 16 MiB scoped-VMEM default (raised explicitly below).
        return dict(max_block_rows=4096, vmem_limit=48 * _MIB, num_splits=1)
    # Unknown chip: conservative defaults.
    return dict(max_block_rows=2048, vmem_limit=32 * _MIB, num_splits=1)


def _sumsq_jax(a: jax.Array, b: jax.Array) -> jax.Array:
    """Plain-JAX sum of squared diffs with nan->0 (for tails / tiny inputs)."""
    a = a.astype(jnp.float32)
    b = b.astype(jnp.float32)
    a = jnp.where(jnp.isnan(a), jnp.float32(0.0), a)
    b = jnp.where(jnp.isnan(b), jnp.float32(0.0), b)
    d = a - b
    return jnp.sum(d * d, dtype=jnp.float32)


def _make_rmse_partial_kernel(valid_rows: int, block_rows: int,
                              steps_per_split: int):
    """Accumulates per-split (8, LANES) partial sums of squared differences."""

    def kernel(yp_ref, yt_ref, o_ref):
        p = pl.program_id(0)   # split ("parallel")
        i = pl.program_id(1)   # step within split ("arbitrary" / reduction)

        @pl.when(i == 0)
        def _():
            o_ref[...] = jnp.zeros_like(o_ref)

        yp = yp_ref[...].astype(jnp.float32)
        yt = yt_ref[...].astype(jnp.float32)
        # nan_to_num(nan=0.0).
        yp = jnp.where(jnp.isnan(yp), jnp.float32(0.0), yp)
        yt = jnp.where(jnp.isnan(yt), jnp.float32(0.0), yt)
        d = yp - yt
        sq = d * d

        # Logical (unclamped) global row offset of this block.
        row_start = (p * steps_per_split + i) * block_rows
        is_full = row_start + block_rows <= valid_rows

        # Steady state: full block, no masking work at all.
        @pl.when(is_full)
        def _():
            partial = sq.reshape(block_rows // 8, 8, LANES).sum(axis=0)
            o_ref[...] += partial[None, :, :]

        # Only the final partial block (or a clamped overrun block on the
        # split axis) pays for the iota + compare + select.
        @pl.when(jnp.logical_not(is_full))
        def _():
            local_row = jax.lax.broadcasted_iota(jnp.int32, (block_rows, LANES), 0)
            keep = (row_start + local_row) < valid_rows
            sq_m = jnp.where(keep, sq, jnp.float32(0.0))
            partial = sq_m.reshape(block_rows // 8, 8, LANES).sum(axis=0)
            o_ref[...] += partial[None, :, :]

    return kernel


def rmse_pallas(y_pred: jax.Array, y_true: jax.Array, eps: float = 1e-8) -> jax.Array:
    assert y_pred.shape == y_true.shape, "y_pred / y_true shape mismatch"
    n = int(y_pred.size)
    assert n > 0

    yp = y_pred.reshape(-1)
    yt = y_true.reshape(-1)

    rows_total = n // LANES          # full 128-lane rows
    if rows_total < 8:
        # Too small for a (8,128)-aligned tile: reduce entirely in JAX.
        total = _sumsq_jax(yp, yt)
        return jnp.sqrt(total / jnp.float32(n) + jnp.float32(eps))

    n_kernel = rows_total * LANES
    tail = n - n_kernel              # < 128 leftover elements

    cfg = _device_config()
    block_rows = min(cfg["max_block_rows"], (rows_total // 8) * 8)
    num_blocks = pl.cdiv(rows_total, block_rows)
    num_splits = cfg["num_splits"] if num_blocks >= 8 else 1
    steps_per_split = pl.cdiv(num_blocks, num_splits)
    exact = (num_splits * steps_per_split == num_blocks)

    yp2d = (yp if tail == 0 else yp[:n_kernel]).reshape(rows_total, LANES)
    yt2d = (yt if tail == 0 else yt[:n_kernel]).reshape(rows_total, LANES)

    def in_map(p, i):
        b = p * steps_per_split + i
        if not exact:
            # Clamp overrun steps to a valid block; fully masked in-kernel.
            b = jnp.minimum(b, num_blocks - 1)
        return (b, 0)

    partials = pl.pallas_call(
        _make_rmse_partial_kernel(rows_total, block_rows, steps_per_split),
        out_shape=jax.ShapeDtypeStruct((num_splits, 8, LANES), jnp.float32),
        grid_spec=pltpu.PrefetchScalarGridSpec(
            num_scalar_prefetch=0,
            grid=(num_splits, steps_per_split),
            in_specs=[
                pl.BlockSpec((block_rows, LANES), in_map),
                pl.BlockSpec((block_rows, LANES), in_map),
            ],
            out_specs=pl.BlockSpec((1, 8, LANES), lambda p, i: (p, 0, 0)),
        ),
        compiler_params=pltpu.CompilerParams(
            dimension_semantics=("parallel", "arbitrary"),
            vmem_limit_bytes=cfg["vmem_limit"],
        ),
    )(yp2d, yt2d)

    # Tiny epilogue: combine per-split vector partials, add the <128-element
    # JAX-reduced tail, divide by the true element count, sqrt(mse + eps).
    total = jnp.sum(partials, dtype=jnp.float32)
    if tail:
        total = total + _sumsq_jax(yp[n_kernel:], yt[n_kernel:])
    return jnp.sqrt(total / jnp.float32(n) + jnp.float32(eps))


if __name__ == "__main__":
    key = jax.random.PRNGKey(0)
    k1, k2, k3, k4, k5, k6 = jax.random.split(key, 6)
    eps = 1e-8

    def ref_rmse(p, t):
        p = jnp.where(jnp.isnan(p), 0.0, p).astype(jnp.float32)
        t = jnp.where(jnp.isnan(t), 0.0, t).astype(jnp.float32)
        return jnp.sqrt(jnp.mean((p - t) ** 2) + eps)

    # 1) Small NCHW-like shape (clean path: zero-copy reshape, no masking).
    shape = (2, 4, 16, 16)
    y_pred = jax.random.normal(k1, shape, dtype=jnp.float32)
    y_true = jax.random.normal(k2, shape, dtype=jnp.float32)
    out = jax.block_until_ready(rmse_pallas(y_pred, y_true, eps=eps))
    assert jnp.allclose(out, ref_rmse(y_pred, y_true), rtol=1e-5, atol=1e-6), out

    # 2) Same shape with NaNs injected (nan_to_num path).
    y_pred_nan = y_pred.at[0, 0, 0, 0].set(jnp.nan).at[1, 2, 3, 4].set(jnp.nan)
    y_true_nan = y_true.at[0, 1, 2, 3].set(jnp.nan)
    out = jax.block_until_ready(rmse_pallas(y_pred_nan, y_true_nan, eps=eps))
    assert jnp.allclose(out, ref_rmse(y_pred_nan, y_true_nan), rtol=1e-5, atol=1e-6), out

    # 3) Tiny ragged size (< 8 lane-rows): pure-JAX fallback path.
    shape2 = (2, 3, 7, 5)
    y_pred2 = jax.random.normal(k3, shape2, dtype=jnp.float32)
    y_true2 = jax.random.normal(k4, shape2, dtype=jnp.float32)
    out = jax.block_until_ready(rmse_pallas(y_pred2, y_true2, eps=eps))
    assert jnp.allclose(out, ref_rmse(y_pred2, y_true2), rtol=1e-5, atol=1e-6), out

    # 4) Medium ragged size: kernel prefix (with masked final partial block)
    #    plus a <128-element JAX tail.
    shape3 = (4, 1000)
    y_pred3 = jax.random.normal(k5, shape3, dtype=jnp.float32)
    y_true3 = jax.random.normal(k6, shape3, dtype=jnp.float32)
    out = jax.block_until_ready(rmse_pallas(y_pred3, y_true3, eps=eps))
    assert jnp.allclose(out, ref_rmse(y_pred3, y_true3), rtol=1e-5, atol=1e-6), out

    print("KERNEL_OK")
</pallas_src>

<mosaic_0001>
module attributes {stable_mosaic.version = 11 : i64} {
  func.func @kernel(%arg0: i32, %arg1: i32, %arg2: memref<16x128xf32, #tpu.memory_space<vmem>>, %arg3: memref<16x128xf32, #tpu.memory_space<vmem>>, %arg4: memref<1x8x128xf32, #tpu.memory_space<vmem>>) attributes {dimension_semantics = [#tpu.dimension_semantics<parallel>, #tpu.dimension_semantics<arbitrary>], iteration_bounds = array<i64: 1, 1>, scalar_prefetch = 0 : i64, scratch_operands = 0 : i64, tpu.core_type = #tpu.core_type<tc>, window_params = [{transform_indices = @transform_0, window_bounds = array<i64: 16, 128>}, {transform_indices = @transform_1, window_bounds = array<i64: 16, 128>}, {transform_indices = @transform_2, window_bounds = array<i64: 1, 8, 128>}]} {
    %c0_i32 = arith.constant 0 : i32
    %0 = arith.cmpi eq, %arg1, %c0_i32 : i32
    %1 = arith.extui %0 : i1 to i32
    %c0_i32_0 = arith.constant 0 : i32
    %2 = arith.cmpi ne, %1, %c0_i32_0 : i32
    scf.if %2 {
      %cst_9 = arith.constant 0.000000e+00 : f32
      %23 = vector.broadcast %cst_9 : f32 to vector<1x8x128xf32>
      %c0_10 = arith.constant 0 : index
      %c0_11 = arith.constant 0 : index
      %c0_12 = arith.constant 0 : index
      %24 = vector.load %arg4[%c0_10, %c0_11, %c0_12] : memref<1x8x128xf32, #tpu.memory_space<vmem>>, vector<1x8x128xf32>
      tpu.vector_store %arg4[%c0_10, %c0_11, %c0_12], %23 {strides = array<i32>} : memref<1x8x128xf32, #tpu.memory_space<vmem>>, vector<1x8x128xf32>,
    } else {
    }
    %c0 = arith.constant 0 : index
    %c0_1 = arith.constant 0 : index
    %3 = vector.load %arg2[%c0, %c0_1] : memref<16x128xf32, #tpu.memory_space<vmem>>, vector<16x128xf32>
    %c0_2 = arith.constant 0 : index
    %c0_3 = arith.constant 0 : index
    %4 = vector.load %arg3[%c0_2, %c0_3] : memref<16x128xf32, #tpu.memory_space<vmem>>, vector<16x128xf32>
    %5 = arith.cmpf one, %3, %3 : vector<16x128xf32>
    %cst = arith.constant 0.000000e+00 : f32
    %6 = vector.broadcast %cst : f32 to vector<16x128xf32>
    %7 = arith.select %5, %6, %3 : vector<16x128xi1>, vector<16x128xf32>
    %8 = arith.cmpf one, %4, %4 : vector<16x128xf32>
    %cst_4 = arith.constant 0.000000e+00 : f32
    %9 = vector.broadcast %cst_4 : f32 to vector<16x128xf32>
    %10 = arith.select %8, %9, %4 : vector<16x128xi1>, vector<16x128xf32>
    %11 = arith.subf %7, %10 : vector<16x128xf32>
    %12 = arith.mulf %11, %11 : vector<16x128xf32>
    %c1_i32 = arith.constant 1 : i32
    %13 = arith.muli %arg0, %c1_i32 : i32
    %14 = arith.addi %13, %arg1 : i32
    %c16_i32 = arith.constant 16 : i32
    %15 = arith.muli %14, %c16_i32 : i32
    %c16_i32_5 = arith.constant 16 : i32
    %16 = arith.addi %15, %c16_i32_5 : i32
    %c16_i32_6 = arith.constant 16 : i32
    %17 = arith.cmpi sle, %16, %c16_i32_6 : i32
    %18 = arith.extui %17 : i1 to i32
    %c0_i32_7 = arith.constant 0 : i32
    %19 = arith.cmpi ne, %18, %c0_i32_7 : i32
    scf.if %19 {
      %23 = vector.shape_cast %12 : vector<16x128xf32> to vector<2x8x128xf32>
      %cst_9 = arith.constant dense<0.000000e+00> : vector<8x128xf32>
      %24 = vector.multi_reduction <add>, %23, %cst_9 [0] : vector<2x8x128xf32> to vector<8x128xf32>
      %c0_10 = arith.constant 0 : index
      %c0_11 = arith.constant 0 : index
      %c0_12 = arith.constant 0 : index
      %25 = vector.load %arg4[%c0_10, %c0_11, %c0_12] : memref<1x8x128xf32, #tpu.memory_space<vmem>>, vector<1x8x128xf32>
      %26 = vector.shape_cast %24 : vector<8x128xf32> to vector<1x8x128xf32>
      %27 = arith.addf %25, %26 : vector<1x8x128xf32>
      %c0_13 = arith.constant 0 : index
      %c0_14 = arith.constant 0 : index
      %c0_15 = arith.constant 0 : index
      %28 = vector.load %arg4[%c0_13, %c0_14, %c0_15] : memref<1x8x128xf32, #tpu.memory_space<vmem>>, vector<1x8x128xf32>
      tpu.vector_store %arg4[%c0_13, %c0_14, %c0_15], %27 {strides = array<i32>} : memref<1x8x128xf32, #tpu.memory_space<vmem>>, vector<1x8x128xf32>,
    } else {
    }
    %true = arith.constant true
    %20 = arith.xori %17, %true : i1
    %21 = arith.extui %20 : i1 to i32
    %c0_i32_8 = arith.constant 0 : i32
    %22 = arith.cmpi ne, %21, %c0_i32_8 : i32
    scf.if %22 {
      %23 = tpu.iota {dimensions = array<i32: 0>} : vector<16x128xi32>
      %24 = vector.broadcast %15 : i32 to vector<16x128xi32>
      %25 = arith.addi %24, %23 : vector<16x128xi32>
      %c16_i32_9 = arith.constant 16 : i32
      %26 = vector.broadcast %c16_i32_9 : i32 to vector<16x128xi32>
      %27 = arith.cmpi slt, %25, %26 : vector<16x128xi32>
      %cst_10 = arith.constant 0.000000e+00 : f32
      %28 = vector.broadcast %cst_10 : f32 to vector<16x128xf32>
      %29 = arith.select %27, %12, %28 : vector<16x128xi1>, vector<16x128xf32>
      %30 = vector.shape_cast %29 : vector<16x128xf32> to vector<2x8x128xf32>
      %cst_11 = arith.constant dense<0.000000e+00> : vector<8x128xf32>
      %31 = vector.multi_reduction <add>, %30, %cst_11 [0] : vector<2x8x128xf32> to vector<8x128xf32>
      %c0_12 = arith.constant 0 : index
      %c0_13 = arith.constant 0 : index
      %c0_14 = arith.constant 0 : index
      %32 = vector.load %arg4[%c0_12, %c0_13, %c0_14] : memref<1x8x128xf32, #tpu.memory_space<vmem>>, vector<1x8x128xf32>
      %33 = vector.shape_cast %31 : vector<8x128xf32> to vector<1x8x128xf32>
      %34 = arith.addf %32, %33 : vector<1x8x128xf32>
      %c0_15 = arith.constant 0 : index
      %c0_16 = arith.constant 0 : index
      %c0_17 = arith.constant 0 : index
      %35 = vector.load %arg4[%c0_15, %c0_16, %c0_17] : memref<1x8x128xf32, #tpu.memory_space<vmem>>, vector<1x8x128xf32>
      tpu.vector_store %arg4[%c0_15, %c0_16, %c0_17], %34 {strides = array<i32>} : memref<1x8x128xf32, #tpu.memory_space<vmem>>, vector<1x8x128xf32>,
    } else {
    }
    return
  }
  func.func @transform_0(%arg0: i32, %arg1: i32) -> (i32, i32) {
    %c1_i32 = arith.constant 1 : i32
    %0 = arith.muli %arg0, %c1_i32 : i32
    %1 = arith.addi %0, %arg1 : i32
    %c0_i32 = arith.constant 0 : i32
    %c0_i32_0 = arith.constant 0 : i32
    return %1, %c0_i32 : i32, i32
  }
  func.func @transform_1(%arg0: i32, %arg1: i32) -> (i32, i32) {
    %c1_i32 = arith.constant 1 : i32
    %0 = arith.muli %arg0, %c1_i32 : i32
    %1 = arith.addi %0, %arg1 : i32
    %c0_i32 = arith.constant 0 : i32
    %c0_i32_0 = arith.constant 0 : i32
    return %1, %c0_i32 : i32, i32
  }
  func.func @transform_2(%arg0: i32, %arg1: i32) -> (i32, i32, i32) {
    %c0_i32 = arith.constant 0 : i32
    %c0_i32_0 = arith.constant 0 : i32
    %c0_i32_1 = arith.constant 0 : i32
    return %arg0, %c0_i32, %c0_i32_0 : i32, i32, i32
  }
}

</mosaic_0001>

<llo_original>
// kernel: tpu_custom_call.1
$region0: #{tpu_custom_call.1}
  #allocation0 [shape = 'u32[]', space=smem, size = 0x4, offset = 0x4, fixed_abs, tag = 'smem constant byte address 0x4 - core index']
  #allocation1 [shape = 'u32[144,128]{1,0:T(1,128)}', space=vmem, size = 0x12000, scoped, tag = 'internal scratch']
  %s0 = inlined_call_operand.hbm [shape: f32[16,128], index: 0, kind: input, shape index: {}]
  %s1 = inlined_call_operand.hbm [shape: f32[16,128], index: 1, kind: input, shape index: {}]
  %s2 = inlined_call_operand.hbm [shape: f32[1,8,128], index: 2, kind: output, shape index: {}]
  %s3 = sld [smem:[#allocation0]]
  $region38: #{tpu_custom_call.1} parent=0
    _
  %s5 = ssub.s32 1, %s3
  %s6 = scalar_select 0, %s5, %s3
  $region1: #{tpu_custom_call.1} parent=0
    #allocation2 [shape = 'u8[8192]{0}', space=vmem, size = 0x2000, scoped, tag = 'input window, operand 0, single buffered']
    #allocation3 [shape = 's32[1]{0}', space=sflag, size = 0x4, scoped, tag = 'scoped memory for tpu_custom_call.1']
    #allocation4 [shape = 's32[1]{0}', space=sflag, size = 0x4, scoped, tag = 'scoped memory for tpu_custom_call.1']
    #allocation5 [shape = 'u8[8192]{0}', space=vmem, size = 0x2000, scoped, tag = 'input window, operand 1, single buffered']
    #allocation6 [shape = 's32[1]{0}', space=sflag, size = 0x4, scoped, tag = 'scoped memory for tpu_custom_call.1']
    #allocation7 [shape = 'u8[4096]{0}', space=vmem, size = 0x1000, scoped, tag = 'output window, operand 0, single buffered']
    %7 = vsyncpa [#allocation3], 0
    %8 = vsyncpa [#allocation6], 0
    %9 = vsyncpa [#allocation4], 0
    // Predicated region
    $region2: #{tpu_custom_call.1} parent=1 // pred_check
      _
    $region3: #{tpu_custom_call.1} parent=1 // pred_check_branch
      %11 = sbr.rel (0) target = $region5
    $region4: #{tpu_custom_call.1} parent=1 // pred_region
      %s12 = sadd.s32 0, 0
      %s13 = smul.u32 2, %s12
      %s15 = ssub.s32 256, 256
      %16 = vsyncadd [#allocation3], %s15
      %s17 = smul.addr %s13, 128
      %s18 = scalar_lea.hbm %s0, %s17
      %s19 = sshll.u32 [#allocation2], 4
      %s20 = int_to_ptr.vmem [resolvable:$true] %s19
      %25 = dma.hbm_to_vmem [thread:$0]  %s18, 256, %s20, [#allocation3], 128, 128, 8
    $region5: #{tpu_custom_call.1} parent=1 // pred_fallthru
      _
    // Predicated region
    $region6: #{tpu_custom_call.1} parent=1 // pred_check
      _
    $region7: #{tpu_custom_call.1} parent=1 // pred_check_branch
      %27 = sbr.rel (0) target = $region9
    $region8: #{tpu_custom_call.1} parent=1 // pred_region
      %s28 = sadd.s32 0, 0
      %s29 = smul.u32 2, %s28
      %s31 = ssub.s32 256, 256
      %32 = vsyncadd [#allocation6], %s31
      %s33 = smul.addr %s29, 128
      %s34 = scalar_lea.hbm %s1, %s33
      %s35 = sshll.u32 [#allocation5], 4
      %s36 = int_to_ptr.vmem [resolvable:$true] %s35
      %41 = dma.hbm_to_vmem [thread:$0]  %s34, 256, %s36, [#allocation6], 128, 128, 8
    $region9: #{tpu_custom_call.1} parent=1 // pred_fallthru
      _
    // Predicated region
    $region10: #{tpu_custom_call.1} parent=1 // pred_check
      _
    $region11: #{tpu_custom_call.1} parent=1 // pred_check_branch
      %43 = sbr.rel (0) target = $region13
    $region12: #{tpu_custom_call.1} parent=1 // pred_region
      %44 = dma.done [#allocation3], 256
    $region13: #{tpu_custom_call.1} parent=1 // pred_fallthru
      _
    // Predicated region
    $region14: #{tpu_custom_call.1} parent=1 // pred_check
      _
    $region15: #{tpu_custom_call.1} parent=1 // pred_check_branch
      %46 = sbr.rel (0) target = $region17
    $region16: #{tpu_custom_call.1} parent=1 // pred_region
      %47 = dma.done [#allocation6], 256
    $region17: #{tpu_custom_call.1} parent=1 // pred_fallthru
      _
    %s48 = sadd.s32 0, 0
    %s49 = smul.u32 2, %s48
    %s50 = sadd.s32 0, 0
    %s51 = smul.u32 2, %s50
    %p52 = scmp.eq.s32.totalorder 0, 0
    // Predicated region
    $region18: #{tpu_custom_call.1} parent=1 // pred_check
      %p53 = pneg %p52
    $region19: #{tpu_custom_call.1} parent=1 // pred_check_branch
      %55 = sbr.rel (%p53) target = $region21
    $region20: #{tpu_custom_call.1} parent=1 // pred_region
      %56 = vst [vmem:[#allocation7] sm:$0xff] 0.0
    $region21: #{tpu_custom_call.1} parent=1 // pred_fallthru
      _
    %v57 = vld [vmem:[#allocation2] sm:$0xff]
    %v58 = vld [vmem:[#allocation2 + $0x8] sm:$0xff]
    %v59 = vld [vmem:[#allocation5] sm:$0xff]
    %v60 = vld [vmem:[#allocation5 + $0x8] sm:$0xff]
    %vm61 = vcmp.ne.f32.partialorder %v57, %v57
    %vm62 = vcmp.ne.f32.partialorder %v58, %v58
    %v63 = vsel %vm61, 0.0, %v57
    %v64 = vsel %vm62, 0.0, %v58
    %vm65 = vcmp.ne.f32.partialorder %v59, %v59
    %vm66 = vcmp.ne.f32.partialorder %v60, %v60
    %v67 = vsel %vm65, 0.0, %v59
    %v68 = vsel %vm66, 0.0, %v60
    %v69 = vsub.f32 %v63, %v67
    %v70 = vsub.f32 %v64, %v68
    %v71 = vmul.f32 %v69, %v69
    %v72 = vmul.f32 %v70, %v70
    %s73 = sadd.s32 0, 0
    %s74 = smul.u32 %s73, 16
    %s75 = sadd.s32 %s74, 16
    %p76 = scmp.le.s32.totalorder %s75, 16
    // Predicated region
    $region22: #{tpu_custom_call.1} parent=1 // pred_check
      %p77 = pneg %p76
    $region23: #{tpu_custom_call.1} parent=1 // pred_check_branch
      %79 = sbr.rel (%p77) target = $region25
    $region24: #{tpu_custom_call.1} parent=1 // pred_region
      %v80 = vadd.f32 %v71, %v72
      %v81 = vld [vmem:[#allocation7] sm:$0xff]
      %v82 = vadd.f32 %v81, %v80
      %83 = vst [vmem:[#allocation7] sm:$0xff] %v82
    $region25: #{tpu_custom_call.1} parent=1 // pred_fallthru
      _
    %p84 = scmp.gt.s32.totalorder %s75, 16
    // Predicated region
    $region26: #{tpu_custom_call.1} parent=1 // pred_check
      %p85 = pneg %p84
    $region27: #{tpu_custom_call.1} parent=1 // pred_check_branch
      %87 = sbr.rel (%p85) target = $region29
    $region28: #{tpu_custom_call.1} parent=1 // pred_region
      %v88 = vlaneseq
      %v89 = vshrl.u32 %v88, 7
      %v90 = vadd.s32 %v89, 8
      %v91 = vstv %s74
      %v92 = vadd.s32 %v91, %v89
      %v93 = vadd.s32 %v91, %v90
      %vm94 = vcmp.lt.s32.totalorder %v92, 16
      %vm95 = vcmp.lt.s32.totalorder %v93, 16
      %v96 = vsel %vm94, %v71, 0.0
      %v97 = vsel %vm95, %v72, 0.0
      %v98 = vadd.f32 %v96, %v97
      %v99 = vld [vmem:[#allocation7] sm:$0xff]
      %v100 = vadd.f32 %v99, %v98
      %101 = vst [vmem:[#allocation7] sm:$0xff] %v100
    $region29: #{tpu_custom_call.1} parent=1 // pred_fallthru
      _
    // Predicated region
    $region30: #{tpu_custom_call.1} parent=1 // pred_check
      _
    $region31: #{tpu_custom_call.1} parent=1 // pred_check_branch
      %103 = sbr.rel (0) target = $region33
    $region32: #{tpu_custom_call.1} parent=1 // pred_region
      %s105 = ssub.s32 128, 128
      %106 = vsyncadd [#allocation4], %s105
      %s108 = sshll.u32 [#allocation7], 4
      %s109 = int_to_ptr.vmem [resolvable:$true] %s108
      %111 = dma.vmem_to_hbm [thread:$0]  %s109, 128, %s2, [#allocation4]
    $region33: #{tpu_custom_call.1} parent=1 // pred_fallthru
      _
    // Predicated region
    $region34: #{tpu_custom_call.1} parent=1 // pred_check
      _
    $region35: #{tpu_custom_call.1} parent=1 // pred_check_branch
      %113 = sbr.rel (0) target = $region37
    $region36: #{tpu_custom_call.1} parent=1 // pred_region
      %114 = dma.done [#allocation4], 128
    $region37: #{tpu_custom_call.1} parent=1 // pred_fallthru
      _
    %115 = vsyncpa [#allocation3], 1
    %116 = vsyncpa [#allocation6], 1
    %117 = vsyncpa [#allocation4], 1

</llo_original>
